<compile_context>
chip_gen: v6e
topology: v6e:2x2x1
jax: 0.10.0
libtpu: 0.0.40
codegen_flags: <defaults>
</compile_context>

<pallas_src>
import jax
import jax.numpy as jnp
from jax import lax
from jax.experimental import pallas as pl
from jax.experimental.pallas import tpu as pltpu

_EPS = 1e-5
_LANE = 128                       # Cout tile width (lane-dense output stores)
_VMEM_CAP = 32 * 1024 * 1024      # conservative scoped-VMEM cap, safe on v5e/v6e/v7x
                                  # (raise toward ~64 MiB on v5e/v6e, keep <=~48 MiB
                                  #  on v7x's 64 MiB VMEM when using bigger tiles)


def _conv_im2col_kernel(x_ref, w_ref, y_ref, stats_ref):
    """One (Cout-tile, spatial-tile) step of the 3x3 conv.

    x_ref:     (tile_h + 2, W + 2, Cin)  halo'd zero-padded input tile
    w_ref:     (9 * Cin, CO_TILE)        weights with (kh, kw, cin) flattened on K
    y_ref:     (tile_h, W, CO_TILE)      conv output tile (f32)
    stats_ref: (2, CO_TILE)              per-tile per-channel [sum, sum_sq]
    """
    tile_h, w_out, co_tile = y_ref.shape
    cin = x_ref.shape[-1]

    # im2col: 9 shifted views concatenated on the channel (lane) axis, so the
    # whole 3x3 window becomes a single K = 9*Cin contraction feeding one fat
    # MXU matmul.  Inputs stay in their native dtype (no f32 up-cast copy).
    cols = []
    for kh in range(3):
        for kw in range(3):
            cols.append(x_ref[kh:kh + tile_h, kw:kw + w_out, :])
    patches = jnp.concatenate(cols, axis=-1)                  # (tile_h, W, 9*Cin)
    lhs = patches.reshape(tile_h * w_out, 9 * cin)            # M = tile_h * W

    acc = jnp.dot(lhs, w_ref[...], preferred_element_type=jnp.float32)
    y_ref[...] = acc.reshape(tile_h, w_out, co_tile).astype(y_ref.dtype)

    # Partial BN statistics for this tile; reduced across tiles in the wrapper.
    s = jnp.sum(acc, axis=0, keepdims=True)                   # (1, CO_TILE)
    ss = jnp.sum(acc * acc, axis=0, keepdims=True)            # (1, CO_TILE)
    stats_ref[...] = jnp.concatenate([s, ss], axis=0)


def _bn_relu_kernel(y_ref, scale_ref, shift_ref, o_ref):
    """Elementwise y = relu(conv * scale + shift) on one lane-dense tile."""
    y = y_ref[...]
    o_ref[...] = jnp.maximum(y * scale_ref[...] + shift_ref[...], 0.0).astype(o_ref.dtype)


def _largest_divisor_leq(n, target):
    best = 1
    for d in range(1, min(n, target) + 1):
        if n % d == 0:
            best = d
    return best


def conv3x3_bn_relu(x_nchw, weight_oihw, gamma, beta, *, tile_h=None):
    """Matches Conv3x3.forward (stride=1, groups=1).  x: (N,Cin,H,W) NCHW."""
    N, Cin, H, W = x_nchw.shape
    Cout, Cin_w, KH, KW = weight_oihw.shape
    assert (KH, KW) == (3, 3) and Cin_w == Cin, "only the default Conv3x3 config"
    # TODO(synk): stride != 1 and groups != 1 Conv3x3 variants are not implemented.

    if tile_h is None or H % tile_h != 0:
        tile_h = _largest_divisor_leq(H, 32)
    ht = H // tile_h

    co_pad = pl.cdiv(Cout, _LANE) * _LANE
    co_tiles = co_pad // _LANE

    # ---- layout glue: NCHW -> NHWC, zero pad, halo'd H tiles, padded Cout ------
    # TODO(synk): accept NHWC at the module boundary and fold the 1-px halo into
    # the kernel (manual DMA / element-indexed windows) to avoid extra HBM passes.
    x_nhwc = jnp.transpose(x_nchw, (0, 2, 3, 1))
    x_pad = jnp.pad(x_nhwc, ((0, 0), (1, 1), (1, 1), (0, 0)))
    x_tiles = jnp.stack(
        [x_pad[:, i * tile_h:i * tile_h + tile_h + 2] for i in range(ht)], axis=1
    ).reshape(N * ht, tile_h + 2, W + 2, Cin)

    w_k_co = jnp.transpose(weight_oihw, (2, 3, 1, 0)).reshape(9 * Cin, Cout)
    w_k_co = jnp.pad(w_k_co, ((0, 0), (0, co_pad - Cout)))
    gamma_p = jnp.pad(gamma.astype(jnp.float32), (0, co_pad - Cout))
    beta_p = jnp.pad(beta.astype(jnp.float32), (0, co_pad - Cout))

    grid = (co_tiles, N * ht)
    cparams = pltpu.CompilerParams(
        dimension_semantics=("parallel", "parallel"),
        vmem_limit_bytes=_VMEM_CAP,
    )

    # ---- pass 1: tiled conv + per-tile BN partial sums -------------------------
    conv_out, stats = pl.pallas_call(
        _conv_im2col_kernel,
        out_shape=(
            jax.ShapeDtypeStruct((N * ht, tile_h, W, co_pad), jnp.float32),
            jax.ShapeDtypeStruct((N * ht, 2, co_pad), jnp.float32),
        ),
        grid=grid,
        in_specs=[
            pl.BlockSpec((None, tile_h + 2, W + 2, Cin), lambda co, t: (t, 0, 0, 0)),
            pl.BlockSpec((9 * Cin, _LANE), lambda co, t: (0, co)),
        ],
        out_specs=(
            pl.BlockSpec((None, tile_h, W, _LANE), lambda co, t: (t, 0, 0, co)),
            pl.BlockSpec((None, 2, _LANE), lambda co, t: (t, 0, co)),
        ),
        compiler_params=cparams,
    )(x_tiles, w_k_co)

    # ---- glue: fold partials into BN scale/shift (parameter-sized, plain JAX) --
    cnt = jnp.float32(N * H * W)
    sums = jnp.sum(stats, axis=0)                              # (2, co_pad)
    mean = sums[0] / cnt
    var = jnp.maximum(sums[1] / cnt - mean * mean, 0.0)        # clamp >= 0 for rsqrt
    inv = lax.rsqrt(var + _EPS)
    scale = (gamma_p * inv).reshape(1, co_pad)
    shift = (beta_p - mean * gamma_p * inv).reshape(1, co_pad)

    # ---- pass 2: tiled BN + ReLU ------------------------------------------------
    y = pl.pallas_call(
        _bn_relu_kernel,
        out_shape=jax.ShapeDtypeStruct((N * ht, tile_h, W, co_pad), x_nchw.dtype),
        grid=grid,
        in_specs=[
            pl.BlockSpec((None, tile_h, W, _LANE), lambda co, t: (t, 0, 0, co)),
            pl.BlockSpec((1, _LANE), lambda co, t: (0, co)),
            pl.BlockSpec((1, _LANE), lambda co, t: (0, co)),
        ],
        out_specs=pl.BlockSpec((None, tile_h, W, _LANE), lambda co, t: (t, 0, 0, co)),
        compiler_params=cparams,
    )(conv_out, scale, shift)

    y = y.reshape(N, ht, tile_h, W, co_pad).reshape(N, H, W, co_pad)[..., :Cout]
    return jnp.transpose(y, (0, 3, 1, 2))                      # back to NCHW


def _reference(x_nchw, weight_oihw, gamma, beta):
    """Pure-JAX reference (lax conv + training-mode BN + ReLU) for validation."""
    y = lax.conv_general_dilated(
        x_nchw.astype(jnp.float32), weight_oihw.astype(jnp.float32),
        window_strides=(1, 1), padding=((1, 1), (1, 1)),
        dimension_numbers=("NCHW", "OIHW", "NCHW"))
    mean = jnp.mean(y, axis=(0, 2, 3), keepdims=True)
    var = jnp.mean((y - mean) ** 2, axis=(0, 2, 3), keepdims=True)
    y = (y - mean) * lax.rsqrt(var + _EPS)
    y = y * gamma.reshape(1, -1, 1, 1) + beta.reshape(1, -1, 1, 1)
    return jnp.maximum(y, 0.0)


if __name__ == "__main__":
    key = jax.random.PRNGKey(0)
    kx, kw, kg, kb = jax.random.split(key, 4)

    N, Cin, H, W = 2, 4, 16, 16
    Cout = 8

    x = jax.random.normal(kx, (N, Cin, H, W), dtype=jnp.float32)
    # Conv2d weight (out_channels, in_channels, 3, 3), bias=False.
    weight = 0.1 * jax.random.normal(kw, (Cout, Cin, 3, 3), dtype=jnp.float32)
    # BatchNorm2d affine params (non-trivial values to exercise the full path).
    gamma = 1.0 + 0.1 * jax.random.normal(kg, (Cout,), dtype=jnp.float32)
    beta = 0.1 * jax.random.normal(kb, (Cout,), dtype=jnp.float32)

    # tile_h=8 exercises the halo'd H tiling (grid = (1, 4)) at this toy shape.
    out = conv3x3_bn_relu(x, weight, gamma, beta, tile_h=8)
    out = jax.block_until_ready(out)

    ref = jax.block_until_ready(_reference(x, weight, gamma, beta))
    assert out.shape == (N, Cout, H, W)
    assert jnp.allclose(out, ref, rtol=1e-4, atol=1e-4), float(
        jnp.max(jnp.abs(out - ref)))

    print("KERNEL_OK")
</pallas_src>

<mosaic_0001>
module attributes {stable_mosaic.version = 11 : i64} {
  func.func @_conv_im2col_kernel(%arg0: i32, %arg1: i32, %arg2: memref<1x10x18x4xf32, #tpu.memory_space<vmem>>, %arg3: memref<36x128xf32, #tpu.memory_space<vmem>>, %arg4: memref<1x8x16x128xf32, #tpu.memory_space<vmem>>, %arg5: memref<1x2x128xf32, #tpu.memory_space<vmem>>) attributes {dimension_semantics = [#tpu.dimension_semantics<parallel>, #tpu.dimension_semantics<parallel>], iteration_bounds = array<i64: 1, 4>, scalar_prefetch = 0 : i64, scratch_operands = 0 : i64, tpu.core_type = #tpu.core_type<tc>, window_params = [{transform_indices = @transform_0, window_bounds = array<i64: 1, 10, 18, 4>}, {transform_indices = @transform_1, window_bounds = array<i64: 36, 128>}, {transform_indices = @transform_2, window_bounds = array<i64: 1, 8, 16, 128>}, {transform_indices = @transform_3, window_bounds = array<i64: 1, 2, 128>}]} {
    %c0 = arith.constant 0 : index
    %c0_0 = arith.constant 0 : index
    %c0_1 = arith.constant 0 : index
    %c0_2 = arith.constant 0 : index
    %0 = vector.load %arg2[%c0, %c0_0, %c0_1, %c0_2] : memref<1x10x18x4xf32, #tpu.memory_space<vmem>>, vector<1x8x16x4xf32>
    %1 = vector.shape_cast %0 : vector<1x8x16x4xf32> to vector<8x16x4xf32>
    %c0_3 = arith.constant 0 : index
    %c0_4 = arith.constant 0 : index
    %c1 = arith.constant 1 : index
    %c0_5 = arith.constant 0 : index
    %2 = vector.load %arg2[%c0_3, %c0_4, %c1, %c0_5] : memref<1x10x18x4xf32, #tpu.memory_space<vmem>>, vector<1x8x16x4xf32>
    %3 = vector.shape_cast %2 : vector<1x8x16x4xf32> to vector<8x16x4xf32>
    %c0_6 = arith.constant 0 : index
    %c0_7 = arith.constant 0 : index
    %c2 = arith.constant 2 : index
    %c0_8 = arith.constant 0 : index
    %4 = vector.load %arg2[%c0_6, %c0_7, %c2, %c0_8] : memref<1x10x18x4xf32, #tpu.memory_space<vmem>>, vector<1x8x16x4xf32>
    %5 = vector.shape_cast %4 : vector<1x8x16x4xf32> to vector<8x16x4xf32>
    %c0_9 = arith.constant 0 : index
    %c1_10 = arith.constant 1 : index
    %c0_11 = arith.constant 0 : index
    %c0_12 = arith.constant 0 : index
    %6 = vector.load %arg2[%c0_9, %c1_10, %c0_11, %c0_12] : memref<1x10x18x4xf32, #tpu.memory_space<vmem>>, vector<1x8x16x4xf32>
    %7 = vector.shape_cast %6 : vector<1x8x16x4xf32> to vector<8x16x4xf32>
    %c0_13 = arith.constant 0 : index
    %c1_14 = arith.constant 1 : index
    %c1_15 = arith.constant 1 : index
    %c0_16 = arith.constant 0 : index
    %8 = vector.load %arg2[%c0_13, %c1_14, %c1_15, %c0_16] : memref<1x10x18x4xf32, #tpu.memory_space<vmem>>, vector<1x8x16x4xf32>
    %9 = vector.shape_cast %8 : vector<1x8x16x4xf32> to vector<8x16x4xf32>
    %c0_17 = arith.constant 0 : index
    %c1_18 = arith.constant 1 : index
    %c2_19 = arith.constant 2 : index
    %c0_20 = arith.constant 0 : index
    %10 = vector.load %arg2[%c0_17, %c1_18, %c2_19, %c0_20] : memref<1x10x18x4xf32, #tpu.memory_space<vmem>>, vector<1x8x16x4xf32>
    %11 = vector.shape_cast %10 : vector<1x8x16x4xf32> to vector<8x16x4xf32>
    %c0_21 = arith.constant 0 : index
    %c2_22 = arith.constant 2 : index
    %c0_23 = arith.constant 0 : index
    %c0_24 = arith.constant 0 : index
    %12 = vector.load %arg2[%c0_21, %c2_22, %c0_23, %c0_24] : memref<1x10x18x4xf32, #tpu.memory_space<vmem>>, vector<1x8x16x4xf32>
    %13 = vector.shape_cast %12 : vector<1x8x16x4xf32> to vector<8x16x4xf32>
    %c0_25 = arith.constant 0 : index
    %c2_26 = arith.constant 2 : index
    %c1_27 = arith.constant 1 : index
    %c0_28 = arith.constant 0 : index
    %14 = vector.load %arg2[%c0_25, %c2_26, %c1_27, %c0_28] : memref<1x10x18x4xf32, #tpu.memory_space<vmem>>, vector<1x8x16x4xf32>
    %15 = vector.shape_cast %14 : vector<1x8x16x4xf32> to vector<8x16x4xf32>
    %c0_29 = arith.constant 0 : index
    %c2_30 = arith.constant 2 : index
    %c2_31 = arith.constant 2 : index
    %c0_32 = arith.constant 0 : index
    %16 = vector.load %arg2[%c0_29, %c2_30, %c2_31, %c0_32] : memref<1x10x18x4xf32, #tpu.memory_space<vmem>>, vector<1x8x16x4xf32>
    %17 = vector.shape_cast %16 : vector<1x8x16x4xf32> to vector<8x16x4xf32>
    %18 = tpu.concatenate %1, %3, %5, %7, %9, %11, %13, %15, %17 in 2 : vector<8x16x4xf32>, vector<8x16x4xf32>, vector<8x16x4xf32>, vector<8x16x4xf32>, vector<8x16x4xf32>, vector<8x16x4xf32>, vector<8x16x4xf32>, vector<8x16x4xf32>, vector<8x16x4xf32> -> vector<8x16x36xf32>
    %19 = vector.shape_cast %18 : vector<8x16x36xf32> to vector<128x36xf32>
    %c0_33 = arith.constant 0 : index
    %c0_34 = arith.constant 0 : index
    %20 = vector.load %arg3[%c0_33, %c0_34] : memref<36x128xf32, #tpu.memory_space<vmem>>, vector<36x128xf32>
    %cst = arith.constant dense<0.000000e+00> : vector<128x128xf32>
    %21 = tpu.matmul %19, %20, %cst {dimension_numbers = #tpu.dot_dimension_numbers<[1], [0], [0], [1], [0, 0, 1, 1], [], []>} : vector<128x36xf32>, vector<36x128xf32>, vector<128x128xf32> -> vector<128x128xf32>
    %22 = vector.shape_cast %21 : vector<128x128xf32> to vector<8x16x128xf32>
    %c0_35 = arith.constant 0 : index
    %c0_36 = arith.constant 0 : index
    %c0_37 = arith.constant 0 : index
    %c0_38 = arith.constant 0 : index
    %23 = vector.load %arg4[%c0_35, %c0_36, %c0_37, %c0_38] : memref<1x8x16x128xf32, #tpu.memory_space<vmem>>, vector<1x8x16x128xf32>
    %24 = vector.shape_cast %23 : vector<1x8x16x128xf32> to vector<8x16x128xf32>
    %25 = vector.shape_cast %22 : vector<8x16x128xf32> to vector<1x8x16x128xf32>
    tpu.vector_store %arg4[%c0_35, %c0_36, %c0_37, %c0_38], %25 {strides = array<i32>} : memref<1x8x16x128xf32, #tpu.memory_space<vmem>>, vector<1x8x16x128xf32>,
    %cst_39 = arith.constant dense<0.000000e+00> : vector<128xf32>
    %26 = vector.multi_reduction <add>, %21, %cst_39 [0] : vector<128x128xf32> to vector<128xf32>
    %27 = vector.shape_cast %26 : vector<128xf32> to vector<1x128xf32>
    %28 = arith.mulf %21, %21 : vector<128x128xf32>
    %cst_40 = arith.constant dense<0.000000e+00> : vector<128xf32>
    %29 = vector.multi_reduction <add>, %28, %cst_40 [0] : vector<128x128xf32> to vector<128xf32>
    %30 = vector.shape_cast %29 : vector<128xf32> to vector<1x128xf32>
    %31 = tpu.concatenate %27, %30 in 0 : vector<1x128xf32>, vector<1x128xf32> -> vector<2x128xf32>
    %c0_41 = arith.constant 0 : index
    %c0_42 = arith.constant 0 : index
    %c0_43 = arith.constant 0 : index
    %32 = vector.load %arg5[%c0_41, %c0_42, %c0_43] : memref<1x2x128xf32, #tpu.memory_space<vmem>>, vector<1x2x128xf32>
    %33 = vector.shape_cast %32 : vector<1x2x128xf32> to vector<2x128xf32>
    %34 = vector.shape_cast %31 : vector<2x128xf32> to vector<1x2x128xf32>
    tpu.vector_store %arg5[%c0_41, %c0_42, %c0_43], %34 {strides = array<i32>} : memref<1x2x128xf32, #tpu.memory_space<vmem>>, vector<1x2x128xf32>,
    return
  }
  func.func @transform_0(%arg0: i32, %arg1: i32) -> (i32, i32, i32, i32) {
    %c0_i32 = arith.constant 0 : i32
    %c0_i32_0 = arith.constant 0 : i32
    %c0_i32_1 = arith.constant 0 : i32
    %c0_i32_2 = arith.constant 0 : i32
    return %arg1, %c0_i32, %c0_i32_0, %c0_i32_1 : i32, i32, i32, i32
  }
  func.func @transform_1(%arg0: i32, %arg1: i32) -> (i32, i32) {
    %c0_i32 = arith.constant 0 : i32
    %c0_i32_0 = arith.constant 0 : i32
    return %c0_i32, %arg0 : i32, i32
  }
  func.func @transform_2(%arg0: i32, %arg1: i32) -> (i32, i32, i32, i32) {
    %c0_i32 = arith.constant 0 : i32
    %c0_i32_0 = arith.constant 0 : i32
    %c0_i32_1 = arith.constant 0 : i32
    return %arg1, %c0_i32, %c0_i32_0, %arg0 : i32, i32, i32, i32
  }
  func.func @transform_3(%arg0: i32, %arg1: i32) -> (i32, i32, i32) {
    %c0_i32 = arith.constant 0 : i32
    %c0_i32_0 = arith.constant 0 : i32
    return %arg1, %c0_i32, %arg0 : i32, i32, i32
  }
}

</mosaic_0001>

<llo_original>
// kernel: tpu_custom_call.1
$region0: #{tpu_custom_call.1}
  #allocation0 [shape = 'u32[]', space=smem, size = 0x4, offset = 0x4, fixed_abs, tag = 'smem constant byte address 0x4 - core index']
  #allocation1 [shape = 'u32[144,128]{1,0:T(1,128)}', space=vmem, size = 0x12000, scoped, tag = 'internal scratch']
  %s0 = inlined_call_operand.vmem [shape: f32[4,10,18,4], index: 0, kind: input, shape index: {}]
  %s1 = inlined_call_operand.vmem [shape: f32[36,128], index: 1, kind: input, shape index: {}]
  %s2 = inlined_call_operand.hbm [shape: f32[4,8,16,128], index: 2, kind: output, shape index: {0}]
  %s3 = inlined_call_operand.hbm [shape: f32[4,2,128], index: 3, kind: output, shape index: {1}]
  %4 = xla_tuple %s2, %s3
  %s5 = sld [smem:[#allocation0]]
  $region49: #{tpu_custom_call.1} parent=0
    _
  %s7 = ssub.s32 1, %s5
  %s8 = scalar_select 0, %s7, %s5
  $region1: #{tpu_custom_call.1} parent=0
    #allocation2 [shape = 'u8[131072]{0}', space=vmem, size = 0x20000, scoped, tag = 'output window, operand 0']
    #allocation3 [shape = 's32[2]{0}', space=sflag, size = 0x8, scoped, tag = 'scoped memory for tpu_custom_call.1']
    #allocation4 [shape = 'u8[2048]{0}', space=vmem, size = 0x800, scoped, tag = 'output window, operand 1']
    #allocation5 [shape = 's32[2]{0}', space=sflag, size = 0x8, scoped, tag = 'scoped memory for tpu_custom_call.1']
    %9 = vsyncpa [#allocation3], 0
    %s10 = scalar_lea.sflag [#allocation3], 1
    %11 = vsyncpa %s10, 0
    %12 = vsyncpa [#allocation5], 0
    %s13 = scalar_lea.sflag [#allocation5], 1
    %14 = vsyncpa %s13, 0
    loop: start=0, step=1, limit=6
    $region2: #{tpu_custom_call.1} parent=1 // loop_pre_header
      _
    $region3: #{tpu_custom_call.1} parent=1 // loop_header
      %s16 = sphi 0, %s20
      %p17 = scmp.ge.s32.totalorder %s16, 6
      %s23 = sphi 0, %s35
      %s24 = sphi 0, %s31
      %s25 = sphi 0, %s23
      %s26 = sphi 0, %s24
      %s27 = sphi 0, %s25
      %s28 = sphi 0, %s26
      %s38 = sphi 0, %s40
      %s41 = sphi 0, %s38
      %s42 = sphi 0, %s41
      %s58 = sphi 0, %s42
      %s64 = sphi 0, %s66
      %s67 = sphi 0, %s64
      %s68 = sphi 0, %s67
      %s84 = sphi 0, %s68
      %s92 = sphi 0, %s94
      %s95 = sphi 0, %s92
      %s96 = sphi 0, %s95
      %s112 = sphi 0, %s96
      %s120 = sphi 0, %s122
      %s123 = sphi 0, %s120
      %s124 = sphi 0, %s123
      %s140 = sphi 0, %s124
    $region4: #{tpu_custom_call.1} parent=1 // loop_header_branch
      %19 = sbr.rel (%p17) target = $region8
    $region5: #{tpu_custom_call.1} parent=1 // loop_body
      %s21 = ssub.s32 %s16, 1
      %s22 = ssub.s32 %s16, 2
      %s29 = sadd.s32 1, %s24
      %p30 = scmp.ge.s32.totalorder %s29, 4
      %s31 = scalar_select %p30, 0, %s29
      %s32 = sadd.s32 1, %s23
      %s33 = scalar_select %p30, %s32, %s23
      %p34 = scmp.ge.s32.totalorder %s33, 1
      %s35 = scalar_select %p34, 0, %s33
      %s36 = ssub.s32 %s24, %s31
      %p37 = scmp.eq.s32.totalorder %s36, 0
      %s39 = sadd.s32 %s38, 1
      %s40 = scalar_select %p37, %s38, %s39
      %p43 = pneg %p37
      %p44 = scmp.eq.s32.totalorder %s16, 3
      %p45 = por %p43, %p44
      %p46 = scmp.ne.s32.totalorder %s38, %s41
      %p47 = scmp.eq.s32.totalorder %s16, 0
      %p48 = por %p46, %p47
      %p49 = scmp.ne.s32.totalorder %s38, %s41
      %p50 = scmp.eq.s32.totalorder %s21, 3
      %p51 = por %p49, %p50
      %p52 = scmp.ne.s32.totalorder %s41, %s42
      %p53 = scmp.eq.s32.totalorder %s21, 0
      %p54 = por %p52, %p53
      %p55 = scmp.ne.s32.totalorder %s41, %s42
      %p56 = scmp.eq.s32.totalorder %s22, 3
      %p57 = por %p55, %p56
      %p59 = scmp.ne.s32.totalorder %s42, %s58
      %p60 = scmp.eq.s32.totalorder %s22, 0
      %p61 = por %p59, %p60
      %s62 = ssub.s32 %s23, %s35
      %p63 = scmp.eq.s32.totalorder %s62, 0
      %s65 = sadd.s32 %s64, 1
      %s66 = scalar_select %p63, %s64, %s65
      %p69 = pneg %p63
      %p70 = scmp.eq.s32.totalorder %s16, 3
      %p71 = por %p69, %p70
      %p72 = scmp.ne.s32.totalorder %s64, %s67
      %p73 = scmp.eq.s32.totalorder %s16, 0
      %p74 = por %p72, %p73
      %p75 = scmp.ne.s32.totalorder %s64, %s67
      %p76 = scmp.eq.s32.totalorder %s21, 3
      %p77 = por %p75, %p76
      %p78 = scmp.ne.s32.totalorder %s67, %s68
      %p79 = scmp.eq.s32.totalorder %s21, 0
      %p80 = por %p78, %p79
      %p81 = scmp.ne.s32.totalorder %s67, %s68
      %p82 = scmp.eq.s32.totalorder %s22, 3
      %p83 = por %p81, %p82
      %p85 = scmp.ne.s32.totalorder %s68, %s84
      %p86 = scmp.eq.s32.totalorder %s22, 0
      %p87 = por %p85, %p86
      %s88 = ssub.s32 %s24, %s31
      %s89 = ssub.s32 %s23, %s35
      %s90 = sor.u32 %s88, %s89
      %p91 = scmp.eq.s32.totalorder %s90, 0
      %s93 = sadd.s32 %s92, 1
      %s94 = scalar_select %p91, %s92, %s93
      %p97 = pneg %p91
      %p98 = scmp.eq.s32.totalorder %s16, 3
      %p99 = por %p97, %p98
      %p100 = scmp.ne.s32.totalorder %s92, %s95
      %p101 = scmp.eq.s32.totalorder %s16, 0
      %p102 = por %p100, %p101
      %p103 = scmp.ne.s32.totalorder %s92, %s95
      %p104 = scmp.eq.s32.totalorder %s21, 3
      %p105 = por %p103, %p104
      %p106 = scmp.ne.s32.totalorder %s95, %s96
      %p107 = scmp.eq.s32.totalorder %s21, 0
      %p108 = por %p106, %p107
      %p109 = scmp.ne.s32.totalorder %s95, %s96
      %p110 = scmp.eq.s32.totalorder %s22, 3
      %p111 = por %p109, %p110
      %p113 = scmp.ne.s32.totalorder %s96, %s112
      %p114 = scmp.eq.s32.totalorder %s22, 0
      %p115 = por %p113, %p114
      %s116 = ssub.s32 %s24, %s31
      %s117 = ssub.s32 %s23, %s35
      %s118 = sor.u32 %s116, %s117
      %p119 = scmp.eq.s32.totalorder %s118, 0
      %s121 = sadd.s32 %s120, 1
      %s122 = scalar_select %p119, %s120, %s121
      %p125 = pneg %p119
      %p126 = scmp.eq.s32.totalorder %s16, 3
      %p127 = por %p125, %p126
      %p128 = scmp.ne.s32.totalorder %s120, %s123
      %p129 = scmp.eq.s32.totalorder %s16, 0
      %p130 = por %p128, %p129
      %p131 = scmp.ne.s32.totalorder %s120, %s123
      %p132 = scmp.eq.s32.totalorder %s21, 3
      %p133 = por %p131, %p132
      %p134 = scmp.ne.s32.totalorder %s123, %s124
      %p135 = scmp.eq.s32.totalorder %s21, 0
      %p136 = por %p134, %p135
      %p137 = scmp.ne.s32.totalorder %s123, %s124
      %p138 = scmp.eq.s32.totalorder %s22, 3
      %p139 = por %p137, %p138
      %p141 = scmp.ne.s32.totalorder %s124, %s140
      %p142 = scmp.eq.s32.totalorder %s22, 0
      %p143 = por %p141, %p142
      %p144 = scmp.le.s32.totalorder 1, %s16
      %p145 = scmp.lt.s32.totalorder %s16, 5
      %p146 = pnand %p144, %p145
      %p147 = pneg %p146
      // Predicated region
      $region9: #{tpu_custom_call.1} parent=5 // pred_check
        _
      $region10: #{tpu_custom_call.1} parent=5 // pred_check_branch
        %149 = sbr.rel (%p146) target = $region12
      $region11: #{tpu_custom_call.1} parent=5 // pred_region
        %s150 = ssub.s32 %s16, 1
        // Predicated region
        $region13: #{tpu_custom_call.1} parent=11 // pred_check
          %p151 = pneg %p80
        $region14: #{tpu_custom_call.1} parent=11 // pred_check_branch
          %153 = sbr.rel (%p151) target = $region16
        $region15: #{tpu_custom_call.1} parent=11 // pred_region
          %p154 = scmp.lt.s32.totalorder %s25, 0
          %s155 = scalar_select %p154, %s25, 0
          %s156 = smul.addr %s155, 8
          %s157 = scalar_lea.vmem %s1, %s156
        $region16: #{tpu_custom_call.1} parent=11 // pred_fallthru
          _
      $region12: #{tpu_custom_call.1} parent=5 // pred_fallthru
        _
      %p158 = scmp.lt.s32.totalorder %s16, 4
      // Predicated region
      $region17: #{tpu_custom_call.1} parent=5 // pred_check
        %p159 = pneg %p158
      $region18: #{tpu_custom_call.1} parent=5 // pred_check_branch
        %161 = sbr.rel (%p159) target = $region20
      $region19: #{tpu_custom_call.1} parent=5 // pred_region
        // Predicated region
        $region21: #{tpu_custom_call.1} parent=19 // pred_check
          %p162 = pneg %p48
        $region22: #{tpu_custom_call.1} parent=19 // pred_check_branch
          %164 = sbr.rel (%p162) target = $region24
        $region23: #{tpu_custom_call.1} parent=19 // pred_region
          %p165 = scmp.lt.s32.totalorder %s24, 3
          %s166 = scalar_select %p165, %s24, 3
          %s167 = smul.addr %s166, 30
          %s168 = smul.addr %s167, 8
          %s169 = scalar_lea.vmem %s0, %s168
        $region24: #{tpu_custom_call.1} parent=19 // pred_fallthru
          _
      $region20: #{tpu_custom_call.1} parent=5 // pred_fallthru
        _
      %p170 = scmp.le.s32.totalorder 1, %s16
      %p171 = scmp.lt.s32.totalorder %s16, 5
      %p172 = pnand %p170, %p171
      %p173 = pneg %p172
      // Predicated region
      $region25: #{tpu_custom_call.1} parent=5 // pred_check
        _
      $region26: #{tpu_custom_call.1} parent=5 // pred_check_branch
        %175 = sbr.rel (%p172) target = $region28
      $region27: #{tpu_custom_call.1} parent=5 // pred_region
        %s176 = ssub.s32 %s16, 1
        %p177 = scmp.lt.s32.totalorder %s26, 3
        %s178 = scalar_select %p177, %s26, 3
        %s179 = smul.addr %s178, 30
        %s180 = smul.addr %s179, 8
        %s181 = scalar_lea.vmem %s0, %s180
        %p182 = pneg %p54
        %p183 = pneg %p51
        %p184 = scmp.lt.s32.totalorder %s25, 0
        %s185 = scalar_select %p184, %s25, 0
        %s186 = smul.addr %s185, 8
        %s187 = scalar_lea.vmem %s1, %s186
        %p188 = pneg %p80
        %p189 = pneg %p77
        %p190 = pneg %p108
        %p191 = pneg %p105
        %s192 = sand.u32 %s95, 1
        %s193 = scalar_lea.sflag [#allocation3], %s192
        %s194 = sand.u32 %s95, 1
        %s195 = smul.addr %s194, 128
        %s196 = scalar_lea.vmem [#allocation2], %s195
        %p197 = pneg %p136
        %p198 = pneg %p133
        %s199 = sand.u32 %s123, 1
        %s200 = scalar_lea.sflag [#allocation5], %s199
        %s201 = sand.u32 %s123, 1
        %s202 = smul.addr %s201, 2
        %s203 = scalar_lea.vmem [#allocation4], %s202
        %p204 = scmp.lt.s32.totalorder %s26, 3
        %s205 = scalar_select %p204, %s26, 3
        %s206 = smul.addr %s205, 30
        %s207 = smul.addr %s206, 8
        %s208 = scalar_lea.vmem %s0, %s207
        %p209 = scmp.lt.s32.totalorder %s25, 0
        %s210 = scalar_select %p209, %s25, 0
        %s211 = smul.addr %s210, 8
        %s212 = scalar_lea.vmem %s1, %s211
        %v213 = vld [vmem:[%s208] sm:$0xff]
        %v214 = vld [vmem:[%s208 + $0x8] sm:$0xff]
        %v215 = vld [vmem:[%s208 + $0x18] sm:$0xff]
        %v216 = vld [vmem:[%s208 + $0x20] sm:$0xff]
        %v217 = vld [vmem:[%s208 + $0x30] sm:$0xff]
        %v218 = vld [vmem:[%s208 + $0x38] sm:$0xff]
        %v219 = vld [vmem:[%s208 + $0x48] sm:$0xff]
        %v220 = vld [vmem:[%s208 + $0x50] sm:$0xff]
        %v221 = vld [vmem:[%s208 + $0x60] sm:$0xff]
        %v222 = vld [vmem:[%s208 + $0x68] sm:$0xff]
        %v223 = vld [vmem:[%s208 + $0x78] sm:$0xff]
        %v224 = vld [vmem:[%s208 + $0x80] sm:$0xff]
        %v225 = vld [vmem:[%s208 + $0x90] sm:$0xff]
        %v226 = vld [vmem:[%s208 + $0x98] sm:$0xff]
        %v227 = vld [vmem:[%s208 + $0xa8] sm:$0xff]
        %v228 = vld [vmem:[%s208 + $0xb0] sm:$0xff]
        %v229 = vld [vmem:[%s208 + $0x1] sm:$0xff]
        %v230 = vld [vmem:[%s208 + $0x9] sm:$0xff]
        %v231 = vld [vmem:[%s208 + $0x19] sm:$0xff]
        %v232 = vld [vmem:[%s208 + $0x21] sm:$0xff]
        %v233 = vld [vmem:[%s208 + $0x31] sm:$0xff]
        %v234 = vld [vmem:[%s208 + $0x39] sm:$0xff]
        %v235 = vld [vmem:[%s208 + $0x49] sm:$0xff]
        %v236 = vld [vmem:[%s208 + $0x51] sm:$0xff]
        %v237 = vld [vmem:[%s208 + $0x61] sm:$0xff]
        %v238 = vld [vmem:[%s208 + $0x69] sm:$0xff]
        %v239 = vld [vmem:[%s208 + $0x79] sm:$0xff]
        %v240 = vld [vmem:[%s208 + $0x81] sm:$0xff]
        %v241 = vld [vmem:[%s208 + $0x91] sm:$0xff]
        %v242 = vld [vmem:[%s208 + $0x99] sm:$0xff]
        %v243 = vld [vmem:[%s208 + $0xa9] sm:$0xff]
        %v244 = vld [vmem:[%s208 + $0xb1] sm:$0xff]
        %v245 = vld [vmem:[%s208 + $0x2] sm:$0xff]
        %v246 = vld [vmem:[%s208 + $0xa] sm:$0xff]
        %v247 = vld [vmem:[%s208 + $0x1a] sm:$0xff]
        %v248 = vld [vmem:[%s208 + $0x22] sm:$0xff]
        %v249 = vld [vmem:[%s208 + $0x32] sm:$0xff]
        %v250 = vld [vmem:[%s208 + $0x3a] sm:$0xff]
        %v251 = vld [vmem:[%s208 + $0x4a] sm:$0xff]
        %v252 = vld [vmem:[%s208 + $0x52] sm:$0xff]
        %v253 = vld [vmem:[%s208 + $0x62] sm:$0xff]
        %v254 = vld [vmem:[%s208 + $0x6a] sm:$0xff]
        %v255 = vld [vmem:[%s208 + $0x7a] sm:$0xff]
        %v256 = vld [vmem:[%s208 + $0x82] sm:$0xff]
        %v257 = vld [vmem:[%s208 + $0x92] sm:$0xff]
        %v258 = vld [vmem:[%s208 + $0x9a] sm:$0xff]
        %v259 = vld [vmem:[%s208 + $0xaa] sm:$0xff]
        %v260 = vld [vmem:[%s208 + $0xb2] sm:$0xff]
        %s261 = scalar_lea.vmem %s208, 24
        %v262 = vld [vmem:[%s261] sm:$0xff]
        %v263 = vld [vmem:[%s261 + $0x8] sm:$0xff]
        %v264 = vld [vmem:[%s261 + $0x18] sm:$0xff]
        %v265 = vld [vmem:[%s261 + $0x20] sm:$0xff]
        %v266 = vld [vmem:[%s261 + $0x30] sm:$0xff]
        %v267 = vld [vmem:[%s261 + $0x38] sm:$0xff]
        %v268 = vld [vmem:[%s261 + $0x48] sm:$0xff]
        %v269 = vld [vmem:[%s261 + $0x50] sm:$0xff]
        %v270 = vld [vmem:[%s261 + $0x60] sm:$0xff]
        %v271 = vld [vmem:[%s261 + $0x68] sm:$0xff]
        %v272 = vld [vmem:[%s261 + $0x78] sm:$0xff]
        %v273 = vld [vmem:[%s261 + $0x80] sm:$0xff]
        %v274 = vld [vmem:[%s261 + $0x90] sm:$0xff]
        %v275 = vld [vmem:[%s261 + $0x98] sm:$0xff]
        %v276 = vld [vmem:[%s261 + $0xa8] sm:$0xff]
        %v277 = vld [vmem:[%s261 + $0xb0] sm:$0xff]
        %v278 = vld [vmem:[%s261 + $0x1] sm:$0xff]
        %v279 = vld [vmem:[%s261 + $0x9] sm:$0xff]
        %v280 = vld [vmem:[%s261 + $0x19] sm:$0xff]
        %v281 = vld [vmem:[%s261 + $0x21] sm:$0xff]
        %v282 = vld [vmem:[%s261 + $0x31] sm:$0xff]
        %v283 = vld [vmem:[%s261 + $0x39] sm:$0xff]
        %v284 = vld [vmem:[%s261 + $0x49] sm:$0xff]
        %v285 = vld [vmem:[%s261 + $0x51] sm:$0xff]
        %v286 = vld [vmem:[%s261 + $0x61] sm:$0xff]
        %v287 = vld [vmem:[%s261 + $0x69] sm:$0xff]
        %v288 = vld [vmem:[%s261 + $0x79] sm:$0xff]
        %v289 = vld [vmem:[%s261 + $0x81] sm:$0xff]
        %v290 = vld [vmem:[%s261 + $0x91] sm:$0xff]
        %v291 = vld [vmem:[%s261 + $0x99] sm:$0xff]
        %v292 = vld [vmem:[%s261 + $0xa9] sm:$0xff]
        %v293 = vld [vmem:[%s261 + $0xb1] sm:$0xff]
        %v294 = vld [vmem:[%s261 + $0x2] sm:$0xff]
        %v295 = vld [vmem:[%s261 + $0xa] sm:$0xff]
        %v296 = vld [vmem:[%s261 + $0x1a] sm:$0xff]
        %v297 = vld [vmem:[%s261 + $0x22] sm:$0xff]
        %v298 = vld [vmem:[%s261 + $0x32] sm:$0xff]
        %v299 = vld [vmem:[%s261 + $0x3a] sm:$0xff]
        %v300 = vld [vmem:[%s261 + $0x4a] sm:$0xff]
        %v301 = vld [vmem:[%s261 + $0x52] sm:$0xff]
        %v302 = vld [vmem:[%s261 + $0x62] sm:$0xff]
        %v303 = vld [vmem:[%s261 + $0x6a] sm:$0xff]
        %v304 = vld [vmem:[%s261 + $0x7a] sm:$0xff]
        %v305 = vld [vmem:[%s261 + $0x82] sm:$0xff]
        %v306 = vld [vmem:[%s261 + $0x92] sm:$0xff]
        %v307 = vld [vmem:[%s261 + $0x9a] sm:$0xff]
        %v308 = vld [vmem:[%s261 + $0xaa] sm:$0xff]
        %v309 = vld [vmem:[%s261 + $0xb2] sm:$0xff]
        %s310 = scalar_lea.vmem %s208, 48
        %v311 = vld [vmem:[%s310] sm:$0xff]
        %v312 = vld [vmem:[%s310 + $0x8] sm:$0xff]
        %v313 = vld [vmem:[%s310 + $0x18] sm:$0xff]
        %v314 = vld [vmem:[%s310 + $0x20] sm:$0xff]
        %v315 = vld [vmem:[%s310 + $0x30] sm:$0xff]
        %v316 = vld [vmem:[%s310 + $0x38] sm:$0xff]
        %v317 = vld [vmem:[%s310 + $0x48] sm:$0xff]
        %v318 = vld [vmem:[%s310 + $0x50] sm:$0xff]
        %v319 = vld [vmem:[%s310 + $0x60] sm:$0xff]
        %v320 = vld [vmem:[%s310 + $0x68] sm:$0xff]
        %v321 = vld [vmem:[%s310 + $0x78] sm:$0xff]
        %v322 = vld [vmem:[%s310 + $0x80] sm:$0xff]
        %v323 = vld [vmem:[%s310 + $0x90] sm:$0xff]
        %v324 = vld [vmem:[%s310 + $0x98] sm:$0xff]
        %v325 = vld [vmem:[%s310 + $0xa8] sm:$0xff]
        %v326 = vld [vmem:[%s310 + $0xb0] sm:$0xff]
        %v327 = vld [vmem:[%s310 + $0x1] sm:$0xff]
        %v328 = vld [vmem:[%s310 + $0x9] sm:$0xff]
        %v329 = vld [vmem:[%s310 + $0x19] sm:$0xff]
        %v330 = vld [vmem:[%s310 + $0x21] sm:$0xff]
        %v331 = vld [vmem:[%s310 + $0x31] sm:$0xff]
        %v332 = vld [vmem:[%s310 + $0x39] sm:$0xff]
        %v333 = vld [vmem:[%s310 + $0x49] sm:$0xff]
        %v334 = vld [vmem:[%s310 + $0x51] sm:$0xff]
        %v335 = vld [vmem:[%s310 + $0x61] sm:$0xff]
        %v336 = vld [vmem:[%s310 + $0x69] sm:$0xff]
        %v337 = vld [vmem:[%s310 + $0x79] sm:$0xff]
        %v338 = vld [vmem:[%s310 + $0x81] sm:$0xff]
        %v339 = vld [vmem:[%s310 + $0x91] sm:$0xff]
        %v340 = vld [vmem:[%s310 + $0x99] sm:$0xff]
        %v341 = vld [vmem:[%s310 + $0xa9] sm:$0xff]
        %v342 = vld [vmem:[%s310 + $0xb1] sm:$0xff]
        %v343 = vld [vmem:[%s310 + $0x2] sm:$0xff]
        %v344 = vld [vmem:[%s310 + $0xa] sm:$0xff]
        %v345 = vld [vmem:[%s310 + $0x1a] sm:$0xff]
        %v346 = vld [vmem:[%s310 + $0x22] sm:$0xff]
        %v347 = vld [vmem:[%s310 + $0x32] sm:$0xff]
        %v348 = vld [vmem:[%s310 + $0x3a] sm:$0xff]
        %v349 = vld [vmem:[%s310 + $0x4a] sm:$0xff]
        %v350 = vld [vmem:[%s310 + $0x52] sm:$0xff]
        %v351 = vld [vmem:[%s310 + $0x62] sm:$0xff]
        %v352 = vld [vmem:[%s310 + $0x6a] sm:$0xff]
        %v353 = vld [vmem:[%s310 + $0x7a] sm:$0xff]
        %v354 = vld [vmem:[%s310 + $0x82] sm:$0xff]
        %v355 = vld [vmem:[%s310 + $0x92] sm:$0xff]
        %v356 = vld [vmem:[%s310 + $0x9a] sm:$0xff]
        %v357 = vld [vmem:[%s310 + $0xaa] sm:$0xff]
        %v358 = vld [vmem:[%s310 + $0xb2] sm:$0xff]
        %375 = vrot.lane.b32.xlu0 %v229, 4
        %v376 = vpop.permute.xlu0 %375
        %377 = vrot.lane.b32.xlu0 %v230, 4
        %v378 = vpop.permute.xlu0 %377
        %379 = vrot.lane.b32.xlu0 %v231, 4
        %v380 = vpop.permute.xlu0 %379
        %381 = vrot.lane.b32.xlu0 %v232, 4
        %v382 = vpop.permute.xlu0 %381
        %383 = vrot.lane.b32.xlu0 %v233, 4
        %v384 = vpop.permute.xlu0 %383
        %385 = vrot.lane.b32.xlu0 %v234, 4
        %v386 = vpop.permute.xlu0 %385
        %387 = vrot.lane.b32.xlu0 %v235, 4
        %v388 = vpop.permute.xlu0 %387
        %389 = vrot.lane.b32.xlu0 %v236, 4
        %v390 = vpop.permute.xlu0 %389
        %391 = vrot.lane.b32.xlu0 %v237, 4
        %v392 = vpop.permute.xlu0 %391
        %393 = vrot.lane.b32.xlu0 %v238, 4
        %v394 = vpop.permute.xlu0 %393
        %395 = vrot.lane.b32.xlu0 %v239, 4
        %v396 = vpop.permute.xlu0 %395
        %397 = vrot.lane.b32.xlu0 %v240, 4
        %v398 = vpop.permute.xlu0 %397
        %399 = vrot.lane.b32.xlu0 %v241, 4
        %v400 = vpop.permute.xlu0 %399
        %401 = vrot.lane.b32.xlu0 %v242, 4
        %v402 = vpop.permute.xlu0 %401
        %403 = vrot.lane.b32.xlu0 %v243, 4
        %v404 = vpop.permute.xlu0 %403
        %405 = vrot.lane.b32.xlu0 %v244, 4
        %v406 = vpop.permute.xlu0 %405
        %439 = vrot.lane.b32.xlu0 %v245, 8
        %v440 = vpop.permute.xlu0 %439
        %441 = vrot.lane.b32.xlu0 %v246, 8
        %v442 = vpop.permute.xlu0 %441
        %443 = vrot.lane.b32.xlu0 %v247, 8
        %v444 = vpop.permute.xlu0 %443
        %445 = vrot.lane.b32.xlu0 %v248, 8
        %v446 = vpop.permute.xlu0 %445
        %447 = vrot.lane.b32.xlu0 %v249, 8
        %v448 = vpop.permute.xlu0 %447
        %449 = vrot.lane.b32.xlu0 %v250, 8
        %v450 = vpop.permute.xlu0 %449
        %451 = vrot.lane.b32.xlu0 %v251, 8
        %v452 = vpop.permute.xlu0 %451
        %453 = vrot.lane.b32.xlu0 %v252, 8
        %v454 = vpop.permute.xlu0 %453
        %455 = vrot.lane.b32.xlu0 %v253, 8
        %v456 = vpop.permute.xlu0 %455
        %457 = vrot.lane.b32.xlu0 %v254, 8
        %v458 = vpop.permute.xlu0 %457
        %459 = vrot.lane.b32.xlu0 %v255, 8
        %v460 = vpop.permute.xlu0 %459
        %461 = vrot.lane.b32.xlu0 %v256, 8
        %v462 = vpop.permute.xlu0 %461
        %463 = vrot.lane.b32.xlu0 %v257, 8
        %v464 = vpop.permute.xlu0 %463
        %465 = vrot.lane.b32.xlu0 %v258, 8
        %v466 = vpop.permute.xlu0 %465
        %467 = vrot.lane.b32.xlu0 %v259, 8
        %v468 = vpop.permute.xlu0 %467
        %469 = vrot.lane.b32.xlu0 %v260, 8
        %v470 = vpop.permute.xlu0 %469
        %503 = vrot.lane.b32.xlu0 %v262, 12
        %v504 = vpop.permute.xlu0 %503
        %505 = vrot.lane.b32.xlu0 %v263, 12
        %v506 = vpop.permute.xlu0 %505
        %507 = vrot.lane.b32.xlu0 %v264, 12
        %v508 = vpop.permute.xlu0 %507
        %509 = vrot.lane.b32.xlu0 %v265, 12
        %v510 = vpop.permute.xlu0 %509
        %511 = vrot.lane.b32.xlu0 %v266, 12
        %v512 = vpop.permute.xlu0 %511
        %513 = vrot.lane.b32.xlu0 %v267, 12
        %v514 = vpop.permute.xlu0 %513
        %515 = vrot.lane.b32.xlu0 %v268, 12
        %v516 = vpop.permute.xlu0 %515
        %517 = vrot.lane.b32.xlu0 %v269, 12
        %v518 = vpop.permute.xlu0 %517
        %519 = vrot.lane.b32.xlu0 %v270, 12
        %v520 = vpop.permute.xlu0 %519
        %521 = vrot.lane.b32.xlu0 %v271, 12
        %v522 = vpop.permute.xlu0 %521
        %523 = vrot.lane.b32.xlu0 %v272, 12
        %v524 = vpop.permute.xlu0 %523
        %525 = vrot.lane.b32.xlu0 %v273, 12
        %v526 = vpop.permute.xlu0 %525
        %527 = vrot.lane.b32.xlu0 %v274, 12
        %v528 = vpop.permute.xlu0 %527
        %529 = vrot.lane.b32.xlu0 %v275, 12
        %v530 = vpop.permute.xlu0 %529
        %531 = vrot.lane.b32.xlu0 %v276, 12
        %v532 = vpop.permute.xlu0 %531
        %533 = vrot.lane.b32.xlu0 %v277, 12
        %v534 = vpop.permute.xlu0 %533
        %567 = vrot.lane.b32.xlu0 %v278, 16
        %v568 = vpop.permute.xlu0 %567
        %569 = vrot.lane.b32.xlu0 %v279, 16
        %v570 = vpop.permute.xlu0 %569
        %571 = vrot.lane.b32.xlu0 %v280, 16
        %v572 = vpop.permute.xlu0 %571
        %573 = vrot.lane.b32.xlu0 %v281, 16
        %v574 = vpop.permute.xlu0 %573
        %575 = vrot.lane.b32.xlu0 %v282, 16
        %v576 = vpop.permute.xlu0 %575
        %577 = vrot.lane.b32.xlu0 %v283, 16
        %v578 = vpop.permute.xlu0 %577
        %579 = vrot.lane.b32.xlu0 %v284, 16
        %v580 = vpop.permute.xlu0 %579
        %581 = vrot.lane.b32.xlu0 %v285, 16
        %v582 = vpop.permute.xlu0 %581
        %583 = vrot.lane.b32.xlu0 %v286, 16
        %v584 = vpop.permute.xlu0 %583
        %585 = vrot.lane.b32.xlu0 %v287, 16
        %v586 = vpop.permute.xlu0 %585
        %587 = vrot.lane.b32.xlu0 %v288, 16
        %v588 = vpop.permute.xlu0 %587
        %589 = vrot.lane.b32.xlu0 %v289, 16
        %v590 = vpop.permute.xlu0 %589
        %591 = vrot.lane.b32.xlu0 %v290, 16
        %v592 = vpop.permute.xlu0 %591
        %593 = vrot.lane.b32.xlu0 %v291, 16
        %v594 = vpop.permute.xlu0 %593
        %595 = vrot.lane.b32.xlu0 %v292, 16
        %v596 = vpop.permute.xlu0 %595
        %597 = vrot.lane.b32.xlu0 %v293, 16
        %v598 = vpop.permute.xlu0 %597
        %631 = vrot.lane.b32.xlu0 %v294, 20
        %v632 = vpop.permute.xlu0 %631
        %633 = vrot.lane.b32.xlu0 %v295, 20
        %v634 = vpop.permute.xlu0 %633
        %635 = vrot.lane.b32.xlu0 %v296, 20
        %v636 = vpop.permute.xlu0 %635
        %637 = vrot.lane.b32.xlu0 %v297, 20
        %v638 = vpop.permute.xlu0 %637
        %639 = vrot.lane.b32.xlu0 %v298, 20
        %v640 = vpop.permute.xlu0 %639
        %641 = vrot.lane.b32.xlu0 %v299, 20
        %v642 = vpop.permute.xlu0 %641
        %643 = vrot.lane.b32.xlu0 %v300, 20
        %v644 = vpop.permute.xlu0 %643
        %645 = vrot.lane.b32.xlu0 %v301, 20
        %v646 = vpop.permute.xlu0 %645
        %647 = vrot.lane.b32.xlu0 %v302, 20
        %v648 = vpop.permute.xlu0 %647
        %649 = vrot.lane.b32.xlu0 %v303, 20
        %v650 = vpop.permute.xlu0 %649
        %651 = vrot.lane.b32.xlu0 %v304, 20
        %v652 = vpop.permute.xlu0 %651
        %653 = vrot.lane.b32.xlu0 %v305, 20
        %v654 = vpop.permute.xlu0 %653
        %655 = vrot.lane.b32.xlu0 %v306, 20
        %v656 = vpop.permute.xlu0 %655
        %657 = vrot.lane.b32.xlu0 %v307, 20
        %v658 = vpop.permute.xlu0 %657
        %659 = vrot.lane.b32.xlu0 %v308, 20
        %v660 = vpop.permute.xlu0 %659
        %661 = vrot.lane.b32.xlu0 %v309, 20
        %v662 = vpop.permute.xlu0 %661
        %695 = vrot.lane.b32.xlu0 %v311, 24
        %v696 = vpop.permute.xlu0 %695
        %697 = vrot.lane.b32.xlu0 %v312, 24
        %v698 = vpop.permute.xlu0 %697
        %699 = vrot.lane.b32.xlu0 %v313, 24
        %v700 = vpop.permute.xlu0 %699
        %701 = vrot.lane.b32.xlu0 %v314, 24
        %v702 = vpop.permute.xlu0 %701
        %703 = vrot.lane.b32.xlu0 %v315, 24
        %v704 = vpop.permute.xlu0 %703
        %705 = vrot.lane.b32.xlu0 %v316, 24
        %v706 = vpop.permute.xlu0 %705
        %707 = vrot.lane.b32.xlu0 %v317, 24
        %v708 = vpop.permute.xlu0 %707
        %709 = vrot.lane.b32.xlu0 %v318, 24
        %v710 = vpop.permute.xlu0 %709
        %711 = vrot.lane.b32.xlu0 %v319, 24
        %v712 = vpop.permute.xlu0 %711
        %713 = vrot.lane.b32.xlu0 %v320, 24
        %v714 = vpop.permute.xlu0 %713
        %715 = vrot.lane.b32.xlu0 %v321, 24
        %v716 = vpop.permute.xlu0 %715
        %717 = vrot.lane.b32.xlu0 %v322, 24
        %v718 = vpop.permute.xlu0 %717
        %719 = vrot.lane.b32.xlu0 %v323, 24
        %v720 = vpop.permute.xlu0 %719
        %721 = vrot.lane.b32.xlu0 %v324, 24
        %v722 = vpop.permute.xlu0 %721
        %723 = vrot.lane.b32.xlu0 %v325, 24
        %v724 = vpop.permute.xlu0 %723
        %725 = vrot.lane.b32.xlu0 %v326, 24
        %v726 = vpop.permute.xlu0 %725
        %759 = vrot.lane.b32.xlu0 %v327, 28
        %v760 = vpop.permute.xlu0 %759
        %761 = vrot.lane.b32.xlu0 %v328, 28
        %v762 = vpop.permute.xlu0 %761
        %763 = vrot.lane.b32.xlu0 %v329, 28
        %v764 = vpop.permute.xlu0 %763
        %765 = vrot.lane.b32.xlu0 %v330, 28
        %v766 = vpop.permute.xlu0 %765
        %767 = vrot.lane.b32.xlu0 %v331, 28
        %v768 = vpop.permute.xlu0 %767
        %769 = vrot.lane.b32.xlu0 %v332, 28
        %v770 = vpop.permute.xlu0 %769
        %771 = vrot.lane.b32.xlu0 %v333, 28
        %v772 = vpop.permute.xlu0 %771
        %773 = vrot.lane.b32.xlu0 %v334, 28
        %v774 = vpop.permute.xlu0 %773
        %775 = vrot.lane.b32.xlu0 %v335, 28
        %v776 = vpop.permute.xlu0 %775
        %777 = vrot.lane.b32.xlu0 %v336, 28
        %v778 = vpop.permute.xlu0 %777
        %779 = vrot.lane.b32.xlu0 %v337, 28
        %v780 = vpop.permute.xlu0 %779
        %781 = vrot.lane.b32.xlu0 %v338, 28
        %v782 = vpop.permute.xlu0 %781
        %783 = vrot.lane.b32.xlu0 %v339, 28
        %v784 = vpop.permute.xlu0 %783
        %785 = vrot.lane.b32.xlu0 %v340, 28
        %v786 = vpop.permute.xlu0 %785
        %787 = vrot.lane.b32.xlu0 %v341, 28
        %v788 = vpop.permute.xlu0 %787
        %789 = vrot.lane.b32.xlu0 %v342, 28
        %v790 = vpop.permute.xlu0 %789
        %823 = vrot.lane.b32.xlu0 %v343, 32
        %v824 = vpop.permute.xlu0 %823
        %825 = vrot.lane.b32.xlu0 %v344, 32
        %v826 = vpop.permute.xlu0 %825
        %827 = vrot.lane.b32.xlu0 %v345, 32
        %v828 = vpop.permute.xlu0 %827
        %829 = vrot.lane.b32.xlu0 %v346, 32
        %v830 = vpop.permute.xlu0 %829
        %831 = vrot.lane.b32.xlu0 %v347, 32
        %v832 = vpop.permute.xlu0 %831
        %833 = vrot.lane.b32.xlu0 %v348, 32
        %v834 = vpop.permute.xlu0 %833
        %835 = vrot.lane.b32.xlu0 %v349, 32
        %v836 = vpop.permute.xlu0 %835
        %837 = vrot.lane.b32.xlu0 %v350, 32
        %v838 = vpop.permute.xlu0 %837
        %839 = vrot.lane.b32.xlu0 %v351, 32
        %v840 = vpop.permute.xlu0 %839
        %841 = vrot.lane.b32.xlu0 %v352, 32
        %v842 = vpop.permute.xlu0 %841
        %843 = vrot.lane.b32.xlu0 %v353, 32
        %v844 = vpop.permute.xlu0 %843
        %845 = vrot.lane.b32.xlu0 %v354, 32
        %v846 = vpop.permute.xlu0 %845
        %847 = vrot.lane.b32.xlu0 %v355, 32
        %v848 = vpop.permute.xlu0 %847
        %849 = vrot.lane.b32.xlu0 %v356, 32
        %v850 = vpop.permute.xlu0 %849
        %851 = vrot.lane.b32.xlu0 %v357, 32
        %v852 = vpop.permute.xlu0 %851
        %853 = vrot.lane.b32.xlu0 %v358, 32
        %v854 = vpop.permute.xlu0 %853
        %vm871 = vcmask 31744
        %v872 = vsel %vm871, %v213, %v376
        %v873 = vsel %vm871, %v214, %v378
        %v874 = vsel %vm871, %v215, %v380
        %v875 = vsel %vm871, %v216, %v382
        %v876 = vsel %vm871, %v217, %v384
        %v877 = vsel %vm871, %v218, %v386
        %v878 = vsel %vm871, %v219, %v388
        %v879 = vsel %vm871, %v220, %v390
        %v880 = vsel %vm871, %v221, %v392
        %v881 = vsel %vm871, %v222, %v394
        %v882 = vsel %vm871, %v223, %v396
        %v883 = vsel %vm871, %v224, %v398
        %v884 = vsel %vm871, %v225, %v400
        %v885 = vsel %vm871, %v226, %v402
        %v886 = vsel %vm871, %v227, %v404
        %v887 = vsel %vm871, %v228, %v406
        %vm888 = vcmask 64512
        %v889 = vsel %vm888, %v872, %v440
        %v890 = vsel %vm888, %v873, %v442
        %v891 = vsel %vm888, %v874, %v444
        %v892 = vsel %vm888, %v875, %v446
        %v893 = vsel %vm888, %v876, %v448
        %v894 = vsel %vm888, %v877, %v450
        %v895 = vsel %vm888, %v878, %v452
        %v896 = vsel %vm888, %v879, %v454
        %v897 = vsel %vm888, %v880, %v456
        %v898 = vsel %vm888, %v881, %v458
        %v899 = vsel %vm888, %v882, %v460
        %v900 = vsel %vm888, %v883, %v462
        %v901 = vsel %vm888, %v884, %v464
        %v902 = vsel %vm888, %v885, %v466
        %v903 = vsel %vm888, %v886, %v468
        %v904 = vsel %vm888, %v887, %v470
        %vm905 = vcmask 97280
        %v906 = vsel %vm905, %v889, %v504
        %v907 = vsel %vm905, %v890, %v506
        %v908 = vsel %vm905, %v891, %v508
        %v909 = vsel %vm905, %v892, %v510
        %v910 = vsel %vm905, %v893, %v512
        %v911 = vsel %vm905, %v894, %v514
        %v912 = vsel %vm905, %v895, %v516
        %v913 = vsel %vm905, %v896, %v518
        %v914 = vsel %vm905, %v897, %v520
        %v915 = vsel %vm905, %v898, %v522
        %v916 = vsel %vm905, %v899, %v524
        %v917 = vsel %vm905, %v900, %v526
        %v918 = vsel %vm905, %v901, %v528
        %v919 = vsel %vm905, %v902, %v530
        %v920 = vsel %vm905, %v903, %v532
        %v921 = vsel %vm905, %v904, %v534
        %vm922 = vcmask 130048
        %v923 = vsel %vm922, %v906, %v568
        %v924 = vsel %vm922, %v907, %v570
        %v925 = vsel %vm922, %v908, %v572
        %v926 = vsel %vm922, %v909, %v574
        %v927 = vsel %vm922, %v910, %v576
        %v928 = vsel %vm922, %v911, %v578
        %v929 = vsel %vm922, %v912, %v580
        %v930 = vsel %vm922, %v913, %v582
        %v931 = vsel %vm922, %v914, %v584
        %v932 = vsel %vm922, %v915, %v586
        %v933 = vsel %vm922, %v916, %v588
        %v934 = vsel %vm922, %v917, %v590
        %v935 = vsel %vm922, %v918, %v592
        %v936 = vsel %vm922, %v919, %v594
        %v937 = vsel %vm922, %v920, %v596
        %v938 = vsel %vm922, %v921, %v598
        %vm939 = vcmask 162816
        %v940 = vsel %vm939, %v923, %v632
        %v941 = vsel %vm939, %v924, %v634
        %v942 = vsel %vm939, %v925, %v636
        %v943 = vsel %vm939, %v926, %v638
        %v944 = vsel %vm939, %v927, %v640
        %v945 = vsel %vm939, %v928, %v642
        %v946 = vsel %vm939, %v929, %v644
        %v947 = vsel %vm939, %v930, %v646
        %v948 = vsel %vm939, %v931, %v648
        %v949 = vsel %vm939, %v932, %v650
        %v950 = vsel %vm939, %v933, %v652
        %v951 = vsel %vm939, %v934, %v654
        %v952 = vsel %vm939, %v935, %v656
        %v953 = vsel %vm939, %v936, %v658
        %v954 = vsel %vm939, %v937, %v660
        %v955 = vsel %vm939, %v938, %v662
        %vm956 = vcmask 195584
        %v957 = vsel %vm956, %v940, %v696
        %v958 = vsel %vm956, %v941, %v698
        %v959 = vsel %vm956, %v942, %v700
        %v960 = vsel %vm956, %v943, %v702
        %v961 = vsel %vm956, %v944, %v704
        %v962 = vsel %vm956, %v945, %v706
        %v963 = vsel %vm956, %v946, %v708
        %v964 = vsel %vm956, %v947, %v710
        %v965 = vsel %vm956, %v948, %v712
        %v966 = vsel %vm956, %v949, %v714
        %v967 = vsel %vm956, %v950, %v716
        %v968 = vsel %vm956, %v951, %v718
        %v969 = vsel %vm956, %v952, %v720
        %v970 = vsel %vm956, %v953, %v722
        %v971 = vsel %vm956, %v954, %v724
        %v972 = vsel %vm956, %v955, %v726
        %vm973 = vcmask 228352
        %v974 = vsel %vm973, %v957, %v760
        %v975 = vsel %vm973, %v958, %v762
        %v976 = vsel %vm973, %v959, %v764
        %v977 = vsel %vm973, %v960, %v766
        %v978 = vsel %vm973, %v961, %v768
        %v979 = vsel %vm973, %v962, %v770
        %v980 = vsel %vm973, %v963, %v772
        %v981 = vsel %vm973, %v964, %v774
        %v982 = vsel %vm973, %v965, %v776
        %v983 = vsel %vm973, %v966, %v778
        %v984 = vsel %vm973, %v967, %v780
        %v985 = vsel %vm973, %v968, %v782
        %v986 = vsel %vm973, %v969, %v784
        %v987 = vsel %vm973, %v970, %v786
        %v988 = vsel %vm973, %v971, %v788
        %v989 = vsel %vm973, %v972, %v790
        %vm990 = vcmask 261120
        %v991 = vsel %vm990, %v974, %v824
        %v992 = vsel %vm990, %v975, %v826
        %v993 = vsel %vm990, %v976, %v828
        %v994 = vsel %vm990, %v977, %v830
        %v995 = vsel %vm990, %v978, %v832
        %v996 = vsel %vm990, %v979, %v834
        %v997 = vsel %vm990, %v980, %v836
        %v998 = vsel %vm990, %v981, %v838
        %v999 = vsel %vm990, %v982, %v840
        %v1000 = vsel %vm990, %v983, %v842
        %v1001 = vsel %vm990, %v984, %v844
        %v1002 = vsel %vm990, %v985, %v846
        %v1003 = vsel %vm990, %v986, %v848
        %v1004 = vsel %vm990, %v987, %v850
        %v1005 = vsel %vm990, %v988, %v852
        %v1006 = vsel %vm990, %v989, %v854
        %v1007 = vld [vmem:[%s212] sm:$0xff]
        %v1008 = vld [vmem:[%s212 + $0x8] sm:$0xff]
        %v1009 = vld [vmem:[%s212 + $0x10] sm:$0xff]
        %v1010 = vld [vmem:[%s212 + $0x18] sm:$0xff]
        %v1011 = vld [vmem:[%s212 + $0x20] sm:$0xf]
        %vm1012 = vcmask 293888
        %v1014 = vsel %vm1012, %v991, 0
        %v1017 = vsel %vm1012, %v992, 0
        %v1020 = vsel %vm1012, %v993, 0
        %v1023 = vsel %vm1012, %v994, 0
        %v1026 = vsel %vm1012, %v995, 0
        %v1029 = vsel %vm1012, %v996, 0
        %v1032 = vsel %vm1012, %v997, 0
        %v1035 = vsel %vm1012, %v998, 0
        %v1038 = vsel %vm1012, %v999, 0
        %v1041 = vsel %vm1012, %v1000, 0
        %v1044 = vsel %vm1012, %v1001, 0
        %v1047 = vsel %vm1012, %v1002, 0
        %v1050 = vsel %vm1012, %v1003, 0
        %v1053 = vsel %vm1012, %v1004, 0
        %v1056 = vsel %vm1012, %v1005, 0
        %v1059 = vsel %vm1012, %v1006, 0
        %vm1061 = vcmask 1043456
        %v1063 = vsel %vm1061, %v1011, 0
        %1065 = vmatprep.subr.mxu0 0.0
        %1066 = vmatpush1.msra.mxu0 0.0
        %1067 = vmatprep.subr.mxu0 0.0
        %1068 = vmatpush1.msra.mxu0 0.0
        %1069 = vmatprep.subr.mxu0 0.0
        %1070 = vmatpush1.msra.mxu0 0.0
        %1071 = vmatprep.subr.mxu0 0.0
        %1072 = vmatpush1.msra.mxu0 0.0
        %1073 = vmatprep.subr.mxu0 0.0
        %1074 = vmatpush1.msra.mxu0 0.0
        %1075 = vmatprep.subr.mxu0 0.0
        %1076 = vmatpush1.msra.mxu0 0.0
        %1077 = vmatprep.subr.mxu0 0.0
        %1078 = vmatpush1.msra.mxu0 0.0
        %1079 = vmatprep.subr.mxu0 0.0
        %1080 = vmatpush1.msra.mxu0 0.0
        %1081 = vmatprep.subr.mxu0 0.0
        %1082 = vmatpush1.msra.mxu0 0.0
        %1083 = vmatprep.subr.mxu0 0.0
        %1084 = vmatpush1.msra.mxu0 0.0
        %1085 = vmatprep.subr.mxu0 0.0
        %1086 = vmatpush1.msra.mxu0 0.0
        %1087 = vmatprep.subr.mxu0 0.0
        %1088 = vmatpush1.msra.mxu0 %v1063
        %1089 = vmatprep.subr.mxu0 0.0
        %1090 = vmatpush1.msra.mxu0 %v1010
        %1091 = vmatprep.subr.mxu0 0.0
        %1092 = vmatpush1.msra.mxu0 %v1009
        %1093 = vmatprep.subr.mxu0 0.0
        %1094 = vmatpush1.msra.mxu0 %v1008
        %1095 = vmatprep.subr.mxu0 0.0
        %1096 = vmatpush1.msra.mxu0 %v1007
        %1097 = vmatprep.subr.mxu0 0.0
        %1098 = vmatpush2.msra.mxu0 0.0
        %1099 = vmatprep.subr.mxu0 0.0
        %1100 = vmatpush2.msra.mxu0 0.0
        %1101 = vmatprep.subr.mxu0 0.0
        %1102 = vmatpush2.msra.mxu0 0.0
        %1103 = vmatprep.subr.mxu0 0.0
        %1104 = vmatpush2.msra.mxu0 0.0
        %1105 = vmatprep.subr.mxu0 0.0
        %1106 = vmatpush2.msra.mxu0 0.0
        %1107 = vmatprep.subr.mxu0 0.0
        %1108 = vmatpush2.msra.mxu0 0.0
        %1109 = vmatprep.subr.mxu0 0.0
        %1110 = vmatpush2.msra.mxu0 0.0
        %1111 = vmatprep.subr.mxu0 0.0
        %1112 = vmatpush2.msra.mxu0 0.0
        %1113 = vmatprep.subr.mxu0 0.0
        %1114 = vmatpush2.msra.mxu0 0.0
        %1115 = vmatprep.subr.mxu0 0.0
        %1116 = vmatpush2.msra.mxu0 0.0
        %1117 = vmatprep.subr.mxu0 0.0
        %1118 = vmatpush2.msra.mxu0 0.0
        %1119 = vmatprep.subr.mxu0 0.0
        %1120 = vmatpush2.msra.mxu0 0.0
        %1121 = vmatprep.subr.mxu0 0.0
        %1122 = vmatpush2.msra.mxu0 0.0
        %1123 = vmatprep.subr.mxu0 0.0
        %1124 = vmatpush2.msra.mxu0 0.0
        %1125 = vmatprep.subr.mxu0 0.0
        %1126 = vmatpush2.msra.mxu0 0.0
        %1127 = vmatprep.subr.mxu0 0.0
        %1128 = vmatpush2.msra.mxu0 0.0
        %1129 = vmatprep.mubr.f32.mxu0 0.0
        %1130 = vmatmul.mubr.f32.gmra.mxu0 %v1014
        %v1131 = vpop.f32.mrf.mxu0
        %v1132 = vadd.f32 0.0, %v1131
        %v1133 = vpop.f32.mrf.mxu0
        %1134 = vmatprep.mubr.f32.mxu0 0.0
        %1135 = vmatmul.mubr.f32.gmra.mxu0 %v1017
        %v1136 = vpop.f32.mrf.mxu0
        %v1137 = vadd.f32 0.0, %v1136
        %v1138 = vpop.f32.mrf.mxu0
        %1139 = vmatprep.mubr.f32.mxu0 0.0
        %1140 = vmatmul.mubr.f32.gmra.mxu0 %v1020
        %v1141 = vpop.f32.mrf.mxu0
        %v1142 = vadd.f32 0.0, %v1141
        %v1143 = vpop.f32.mrf.mxu0
        %1144 = vmatprep.mubr.f32.mxu0 0.0
        %1145 = vmatmul.mubr.f32.gmra.mxu0 %v1023
        %v1146 = vpop.f32.mrf.mxu0
        %v1147 = vadd.f32 0.0, %v1146
        %v1148 = vpop.f32.mrf.mxu0
        %1149 = vmatprep.mubr.f32.mxu0 0.0
        %1150 = vmatmul.mubr.f32.gmra.mxu0 %v1026
        %v1151 = vpop.f32.mrf.mxu0
        %v1152 = vadd.f32 0.0, %v1151
        %v1153 = vpop.f32.mrf.mxu0
        %1154 = vmatprep.mubr.f32.mxu0 0.0
        %1155 = vmatmul.mubr.f32.gmra.mxu0 %v1029
        %v1156 = vpop.f32.mrf.mxu0
        %v1157 = vadd.f32 0.0, %v1156
        %v1158 = vpop.f32.mrf.mxu0
        %1159 = vmatprep.mubr.f32.mxu0 0.0
        %1160 = vmatmul.mubr.f32.gmra.mxu0 %v1032
        %v1161 = vpop.f32.mrf.mxu0
        %v1162 = vadd.f32 0.0, %v1161
        %v1163 = vpop.f32.mrf.mxu0
        %1164 = vmatprep.mubr.f32.mxu0 0.0
        %1165 = vmatmul.mubr.f32.gmra.mxu0 %v1035
        %v1166 = vpop.f32.mrf.mxu0
        %v1167 = vadd.f32 0.0, %v1166
        %v1168 = vpop.f32.mrf.mxu0
        %1169 = vmatprep.mubr.f32.mxu0 0.0
        %1170 = vmatmul.mubr.f32.gmra.mxu0 %v1038
        %v1171 = vpop.f32.mrf.mxu0
        %v1172 = vadd.f32 0.0, %v1171
        %v1173 = vpop.f32.mrf.mxu0
        %1174 = vmatprep.mubr.f32.mxu0 0.0
        %1175 = vmatmul.mubr.f32.gmra.mxu0 %v1041
        %v1176 = vpop.f32.mrf.mxu0
        %v1177 = vadd.f32 0.0, %v1176
        %v1178 = vpop.f32.mrf.mxu0
        %1179 = vmatprep.mubr.f32.mxu0 0.0
        %1180 = vmatmul.mubr.f32.gmra.mxu0 %v1044
        %v1181 = vpop.f32.mrf.mxu0
        %v1182 = vadd.f32 0.0, %v1181
        %v1183 = vpop.f32.mrf.mxu0
        %1184 = vmatprep.mubr.f32.mxu0 0.0
        %1185 = vmatmul.mubr.f32.gmra.mxu0 %v1047
        %v1186 = vpop.f32.mrf.mxu0
        %v1187 = vadd.f32 0.0, %v1186
        %v1188 = vpop.f32.mrf.mxu0
        %1189 = vmatprep.mubr.f32.mxu0 0.0
        %1190 = vmatmul.mubr.f32.gmra.mxu0 %v1050
        %v1191 = vpop.f32.mrf.mxu0
        %v1192 = vadd.f32 0.0, %v1191
        %v1193 = vpop.f32.mrf.mxu0
        %1194 = vmatprep.mubr.f32.mxu0 0.0
        %1195 = vmatmul.mubr.f32.gmra.mxu0 %v1053
        %v1196 = vpop.f32.mrf.mxu0
        %v1197 = vadd.f32 0.0, %v1196
        %v1198 = vpop.f32.mrf.mxu0
        %1199 = vmatprep.mubr.f32.mxu0 0.0
        %1200 = vmatmul.mubr.f32.gmra.mxu0 %v1056
        %v1201 = vpop.f32.mrf.mxu0
        %v1202 = vadd.f32 0.0, %v1201
        %v1203 = vpop.f32.mrf.mxu0
        %1204 = vmatprep.mubr.f32.mxu0 0.0
        %1205 = vmatmul.mubr.f32.gmra.mxu0 %v1059
        %v1206 = vpop.f32.mrf.mxu0
        %v1207 = vadd.f32 0.0, %v1206
        %v1208 = vpop.f32.mrf.mxu0
        %1209 = vdwg.mxu0
        %1210 = vst [vmem:[%s196] sm:$0xff] %v1132
        %1211 = vst [vmem:[%s196 + $0x8] sm:$0xff] %v1137
        %1212 = vst [vmem:[%s196 + $0x10] sm:$0xff] %v1142
        %1213 = vst [vmem:[%s196 + $0x18] sm:$0xff] %v1147
        %1214 = vst [vmem:[%s196 + $0x20] sm:$0xff] %v1152
        %1215 = vst [vmem:[%s196 + $0x28] sm:$0xff] %v1157
        %1216 = vst [vmem:[%s196 + $0x30] sm:$0xff] %v1162
        %1217 = vst [vmem:[%s196 + $0x38] sm:$0xff] %v1167
        %1218 = vst [vmem:[%s196 + $0x40] sm:$0xff] %v1172
        %1219 = vst [vmem:[%s196 + $0x48] sm:$0xff] %v1177
        %1220 = vst [vmem:[%s196 + $0x50] sm:$0xff] %v1182
        %1221 = vst [vmem:[%s196 + $0x58] sm:$0xff] %v1187
        %1222 = vst [vmem:[%s196 + $0x60] sm:$0xff] %v1192
        %1223 = vst [vmem:[%s196 + $0x68] sm:$0xff] %v1197
        %1224 = vst [vmem:[%s196 + $0x70] sm:$0xff] %v1202
        %1225 = vst [vmem:[%s196 + $0x78] sm:$0xff] %v1207
        %v1226 = vadd.f32 %v1132, %v1137
        %v1227 = vadd.f32 %v1226, %v1142
        %v1228 = vadd.f32 %v1227, %v1147
        %v1229 = vadd.f32 %v1228, %v1152
        %v1230 = vadd.f32 %v1229, %v1157
        %v1231 = vadd.f32 %v1230, %v1162
        %v1232 = vadd.f32 %v1231, %v1167
        %v1233 = vadd.f32 %v1232, %v1172
        %v1234 = vadd.f32 %v1233, %v1177
        %v1235 = vadd.f32 %v1234, %v1182
        %v1236 = vadd.f32 %v1235, %v1187
        %v1237 = vadd.f32 %v1236, %v1192
        %v1238 = vadd.f32 %v1237, %v1197
        %v1239 = vadd.f32 %v1238, %v1202
        %v1240 = vadd.f32 %v1239, %v1207
        %v1241 = vrot.slane %v1240, 4
        %v1242 = vadd.f32 %v1240, %v1241
        %v1243 = vrot.slane %v1242, 2
        %v1244 = vadd.f32 %v1242, %v1243
        %v1245 = vrot.slane %v1244, 1
        %v1246 = vadd.f32 %v1244, %v1245
        %v1247 = vmul.f32 %v1132, %v1132
        %v1248 = vmul.f32 %v1137, %v1137
        %v1249 = vmul.f32 %v1142, %v1142
        %v1250 = vmul.f32 %v1147, %v1147
        %v1251 = vmul.f32 %v1152, %v1152
        %v1252 = vmul.f32 %v1157, %v1157
        %v1253 = vmul.f32 %v1162, %v1162
        %v1254 = vmul.f32 %v1167, %v1167
        %v1255 = vmul.f32 %v1172, %v1172
        %v1256 = vmul.f32 %v1177, %v1177
        %v1257 = vmul.f32 %v1182, %v1182
        %v1258 = vmul.f32 %v1187, %v1187
        %v1259 = vmul.f32 %v1192, %v1192
        %v1260 = vmul.f32 %v1197, %v1197
        %v1261 = vmul.f32 %v1202, %v1202
        %v1262 = vmul.f32 %v1207, %v1207
        %v1263 = vadd.f32 %v1247, %v1248
        %v1264 = vadd.f32 %v1263, %v1249
        %v1265 = vadd.f32 %v1264, %v1250
        %v1266 = vadd.f32 %v1265, %v1251
        %v1267 = vadd.f32 %v1266, %v1252
        %v1268 = vadd.f32 %v1267, %v1253
        %v1269 = vadd.f32 %v1268, %v1254
        %v1270 = vadd.f32 %v1269, %v1255
        %v1271 = vadd.f32 %v1270, %v1256
        %v1272 = vadd.f32 %v1271, %v1257
        %v1273 = vadd.f32 %v1272, %v1258
        %v1274 = vadd.f32 %v1273, %v1259
        %v1275 = vadd.f32 %v1274, %v1260
        %v1276 = vadd.f32 %v1275, %v1261
        %v1277 = vadd.f32 %v1276, %v1262
        %v1278 = vrot.slane %v1277, 4
        %v1279 = vadd.f32 %v1277, %v1278
        %v1280 = vrot.slane %v1279, 2
        %v1281 = vadd.f32 %v1279, %v1280
        %v1282 = vrot.slane %v1281, 1
        %v1283 = vadd.f32 %v1281, %v1282
        %vm1284 = vcmask 1040384
        %v1285 = vsel %vm1284, %v1246, %v1283
        %1286 = vst [vmem:[%s203] sm:$0x3] %v1285
        %s1287 = sand.u32 %s95, 1
        %s1288 = scalar_lea.sflag [#allocation3], %s1287
        %s1289 = sand.u32 %s95, 1
        %s1290 = smul.addr %s1289, 128
        %s1291 = scalar_lea.vmem [#allocation2], %s1290
        %s1292 = sand.u32 %s123, 1
        %s1293 = scalar_lea.sflag [#allocation5], %s1292
        %s1294 = sand.u32 %s123, 1
        %s1295 = smul.addr %s1294, 2
        %s1296 = scalar_lea.vmem [#allocation4], %s1295
        // Predicated region
        $region29: #{tpu_custom_call.1} parent=27 // pred_check
          %p1297 = pneg %p105
        $region30: #{tpu_custom_call.1} parent=27 // pred_check_branch
          %1299 = sbr.rel (%p1297) target = $region32
        $region31: #{tpu_custom_call.1} parent=27 // pred_region
          %s1301 = ssub.s32 2048, 2048
          %1302 = vsyncadd %s1288, %s1301
          %s1303 = smul.addr %s26, 16
          %s1304 = sadd.s32 %s25, %s1303
          %s1305 = smul.addr %s1304, 128
          %s1306 = scalar_lea.hbm %s2, %s1305
          %s1307 = sshll.u32 %s1291, 4
          %s1308 = int_to_ptr.vmem [resolvable:$true] %s1307
          %1313 = dma.vmem_to_hbm [thread:$0]  %s1308, 2048, %s1306, %s1288, 128, 128, 8
        $region32: #{tpu_custom_call.1} parent=27 // pred_fallthru
          _
        // Predicated region
        $region33: #{tpu_custom_call.1} parent=27 // pred_check
          %p1314 = pneg %p133
        $region34: #{tpu_custom_call.1} parent=27 // pred_check_branch
          %1316 = sbr.rel (%p1314) target = $region36
        $region35: #{tpu_custom_call.1} parent=27 // pred_region
          %s1318 = ssub.s32 32, 32
          %1319 = vsyncadd %s1293, %s1318
          %s1320 = sadd.s32 %s25, %s26
          %s1321 = smul.addr %s1320, 32
          %s1322 = scalar_lea.hbm %s3, %s1321
          %s1324 = sshll.u32 %s1296, 4
          %s1325 = int_to_ptr.vmem [resolvable:$true] %s1324
          %1327 = dma.vmem_to_hbm [thread:$0]  %s1325, 32, %s1322, %s1293
        $region36: #{tpu_custom_call.1} parent=27 // pred_fallthru
          _
      $region28: #{tpu_custom_call.1} parent=5 // pred_fallthru
        _
      %p1328 = scmp.le.s32.totalorder 2, %s16
      // Predicated region
      $region37: #{tpu_custom_call.1} parent=5 // pred_check
        %p1329 = pneg %p1328
      $region38: #{tpu_custom_call.1} parent=5 // pred_check_branch
        %1331 = sbr.rel (%p1329) target = $region40
      $region39: #{tpu_custom_call.1} parent=5 // pred_region
        %s1332 = ssub.s32 %s16, 2
        // Predicated region
        $region41: #{tpu_custom_call.1} parent=39 // pred_check
          %p1333 = pneg %p111
        $region42: #{tpu_custom_call.1} parent=39 // pred_check_branch
          %1335 = sbr.rel (%p1333) target = $region44
        $region43: #{tpu_custom_call.1} parent=39 // pred_region
          %s1336 = sand.u32 %s96, 1
          %s1337 = scalar_lea.sflag [#allocation3], %s1336
          %s1338 = sand.u32 %s96, 1
          %s1339 = smul.addr %s1338, 128
          %s1340 = scalar_lea.vmem [#allocation2], %s1339
          %1341 = dma.done %s1337, 2048
        $region44: #{tpu_custom_call.1} parent=39 // pred_fallthru
          _
        // Predicated region
        $region45: #{tpu_custom_call.1} parent=39 // pred_check
          %p1342 = pneg %p139
        $region46: #{tpu_custom_call.1} parent=39 // pred_check_branch
          %1344 = sbr.rel (%p1342) target = $region48
        $region47: #{tpu_custom_call.1} parent=39 // pred_region
          %s1345 = sand.u32 %s124, 1
          %s1346 = scalar_lea.sflag [#allocation5], %s1345
          %s1347 = sand.u32 %s124, 1
          %s1348 = smul.addr %s1347, 2
          %s1349 = scalar_lea.vmem [#allocation4], %s1348
          %1350 = dma.done %s1346, 32
        $region48: #{tpu_custom_call.1} parent=39 // pred_fallthru
          _
      $region40: #{tpu_custom_call.1} parent=5 // pred_fallthru
        _
    $region6: #{tpu_custom_call.1} parent=1 // loop_footer
      %s20 = sadd.s32 1, %s16
    $region7: #{tpu_custom_call.1} parent=1 // loop_footer_branch
      %15 = sbr.rel target = $region3
    $region8: #{tpu_custom_call.1} parent=1 // loop_exit
      _
    %1351 = vsyncpa [#allocation3], 1
    %s1352 = scalar_lea.sflag [#allocation3], 1
    %1353 = vsyncpa %s1352, 1
    %1354 = vsyncpa [#allocation5], 1
    %s1355 = scalar_lea.sflag [#allocation5], 1
    %1356 = vsyncpa %s1355, 1

</llo_original>
